<compile_context>
chip_gen: v7x
topology: tpu7x:2x2x1
jax: 0.10.0
libtpu: 0.0.40
codegen_flags: <defaults>
</compile_context>

<pallas_src>
import functools

import jax
import jax.numpy as jnp
from jax.experimental import pallas as pl
from jax.experimental.pallas import tpu as pltpu


def _prompt_assemble_kernel(ctx_ref, prefix_ref, suffix_ref, out_ref):
    # ctx_ref:    (1, n_ctx, D)   shared across all classes
    # prefix_ref: (Bc, 1, D)
    # suffix_ref: (Bc, n_suf, D)
    # out_ref:    (Bc, L, D)   with L = 1 + n_ctx + n_suf
    bc, seq_len, d = out_ref.shape
    n_ctx = ctx_ref.shape[1]

    # Three direct sliced stores: pure vld -> vst copies, no concat temporary.
    out_ref[:, 0:1, :] = prefix_ref[...].astype(out_ref.dtype)
    ctx_b = jnp.broadcast_to(ctx_ref[...], (bc, n_ctx, d))
    out_ref[:, 1:1 + n_ctx, :] = ctx_b.astype(out_ref.dtype)
    out_ref[:, 1 + n_ctx:, :] = suffix_ref[...].astype(out_ref.dtype)


@functools.partial(jax.jit, static_argnames=("block_classes", "out_dtype"))
def prompt_learner_forward(ctx, token_prefix, token_suffix,
                           block_classes=128, out_dtype=None):
    """Pallas implementation of PromptLearner.forward (end position, no learned cls).

    Args:
      ctx:          (n_ctx, ctx_dim)  learnable context vectors.
      token_prefix: (n_cls, 1, ctx_dim) SOS embedding per class.
      token_suffix: (n_cls, n_suf, ctx_dim) class-name/EOS/pad embeddings.
      block_classes: number of classes assembled per grid step.
      out_dtype:    output dtype (e.g. jnp.bfloat16 if the text encoder is bf16);
                    defaults to ctx.dtype.
    Returns:
      prompts: (n_cls, 1 + n_ctx + n_suf, ctx_dim)
    """
    n_ctx, ctx_dim = ctx.shape
    n_cls = token_prefix.shape[0]
    n_suf = token_suffix.shape[1]
    seq_len = 1 + n_ctx + n_suf
    out_dtype = ctx.dtype if out_dtype is None else out_dtype

    # Batch classes per grid step; clamp to the problem size.
    bc = max(1, min(block_classes, n_cls))
    grid = (pl.cdiv(n_cls, bc),)

    # ctx as a 3-D block so the kernel needs no reshape.
    ctx3 = ctx.reshape(1, n_ctx, ctx_dim)

    itemsize_in = jnp.dtype(ctx.dtype).itemsize
    itemsize_out = jnp.dtype(out_dtype).itemsize
    bytes_in = (ctx.size + token_prefix.size + token_suffix.size) * itemsize_in
    bytes_out = n_cls * seq_len * ctx_dim * itemsize_out
    cost = pl.CostEstimate(flops=0, transcendentals=0,
                           bytes_accessed=bytes_in + bytes_out)

    return pl.pallas_call(
        _prompt_assemble_kernel,
        out_shape=jax.ShapeDtypeStruct((n_cls, seq_len, ctx_dim), out_dtype),
        grid_spec=pltpu.PrefetchScalarGridSpec(
            num_scalar_prefetch=0,
            grid=grid,
            in_specs=[
                # shared ctx block (broadcast across classes) -- matches args[0]
                pl.BlockSpec((1, n_ctx, ctx_dim), lambda i: (0, 0, 0)),
                # Bc classes' prefix per grid step
                pl.BlockSpec((bc, 1, ctx_dim), lambda i: (i, 0, 0)),
                # Bc classes' suffix per grid step
                pl.BlockSpec((bc, n_suf, ctx_dim), lambda i: (i, 0, 0)),
            ],
            out_specs=pl.BlockSpec((bc, seq_len, ctx_dim), lambda i: (i, 0, 0)),
        ),
        compiler_params=pltpu.CompilerParams(
            dimension_semantics=("parallel",)),
        cost_estimate=cost,
    )(ctx3, token_prefix, token_suffix)


if __name__ == "__main__":
    # Shapes consistent with the module (kept real-ish but small in n_cls):
    #   ctx_dim=768 (hard-coded in __init__), n_ctx=16, max_length=25 -> suffix=8
    n_cls = 4
    n_ctx = 16
    ctx_dim = 768
    max_len = 25
    n_suf = max_len - 1 - n_ctx  # 8
    dtype = jnp.float32

    key = jax.random.PRNGKey(0)
    k_ctx, k_pre, k_suf = jax.random.split(key, 3)

    # nn.init.normal_(ctx_vectors, std=0.02)
    ctx = (0.02 * jax.random.normal(k_ctx, (n_ctx, ctx_dim))).astype(dtype)
    # Stand-ins for word-embedding lookups (deterministic synthetic values).
    token_prefix = (0.02 * jax.random.normal(k_pre, (n_cls, 1, ctx_dim))).astype(dtype)
    token_suffix = (0.02 * jax.random.normal(k_suf, (n_cls, n_suf, ctx_dim))).astype(dtype)

    # block_classes=2 at this tiny n_cls so the grid still has >=2 steps
    # (demonstrates the multi-class-per-step tiling; real deployments would use
    # 64-256 classes per step).
    prompts = prompt_learner_forward(ctx, token_prefix, token_suffix,
                                     block_classes=2)
    prompts = jax.block_until_ready(prompts)

    # Reference check in plain JAX (same as torch.cat([prefix, ctx_expanded, suffix], -2)).
    ctx_expanded = jnp.broadcast_to(ctx[None], (n_cls, n_ctx, ctx_dim))
    ref = jnp.concatenate([token_prefix, ctx_expanded, token_suffix], axis=1)
    assert prompts.shape == (n_cls, max_len, ctx_dim), prompts.shape
    assert prompts.dtype == dtype, prompts.dtype
    assert jnp.allclose(prompts, ref), "mismatch vs reference"

    print("KERNEL_OK")
</pallas_src>

<mosaic_0001>
module attributes {stable_mosaic.version = 11 : i64} {
  func.func @_prompt_assemble_kernel(%arg0: i32, %arg1: memref<1x16x768xf32, #tpu.memory_space<vmem>>, %arg2: memref<2x1x768xf32, #tpu.memory_space<vmem>>, %arg3: memref<2x8x768xf32, #tpu.memory_space<vmem>>, %arg4: memref<2x25x768xf32, #tpu.memory_space<vmem>>) attributes {dimension_semantics = [#tpu.dimension_semantics<parallel>], iteration_bounds = array<i64: 2>, scalar_prefetch = 0 : i64, scratch_operands = 0 : i64, tpu.core_type = #tpu.core_type<tc>, window_params = [{pipeline_mode = #tpu.pipeline_mode<synchronous>, transform_indices = @transform_0, window_bounds = array<i64: 1, 16, 768>}, {transform_indices = @transform_1, window_bounds = array<i64: 2, 1, 768>}, {transform_indices = @transform_2, window_bounds = array<i64: 2, 8, 768>}, {transform_indices = @transform_3, window_bounds = array<i64: 2, 25, 768>}]} {
    %c0 = arith.constant 0 : index
    %c0_0 = arith.constant 0 : index
    %c0_1 = arith.constant 0 : index
    %0 = vector.load %arg2[%c0, %c0_0, %c0_1] : memref<2x1x768xf32, #tpu.memory_space<vmem>>, vector<2x1x768xf32>
    %c0_2 = arith.constant 0 : index
    %c0_3 = arith.constant 0 : index
    %c0_4 = arith.constant 0 : index
    %1 = vector.load %arg4[%c0_2, %c0_3, %c0_4] : memref<2x25x768xf32, #tpu.memory_space<vmem>>, vector<2x1x768xf32>
    tpu.vector_store %arg4[%c0_2, %c0_3, %c0_4], %0 {strides = array<i32>} : memref<2x25x768xf32, #tpu.memory_space<vmem>>, vector<2x1x768xf32>,
    %c0_5 = arith.constant 0 : index
    %c0_6 = arith.constant 0 : index
    %c0_7 = arith.constant 0 : index
    %2 = vector.load %arg1[%c0_5, %c0_6, %c0_7] : memref<1x16x768xf32, #tpu.memory_space<vmem>>, vector<1x16x768xf32>
    %3 = vector.shape_cast %2 : vector<1x16x768xf32> to vector<1x16x768xf32>
    %4 = vector.broadcast %3 : vector<1x16x768xf32> to vector<2x16x768xf32>
    %c0_8 = arith.constant 0 : index
    %c1 = arith.constant 1 : index
    %c0_9 = arith.constant 0 : index
    %5 = vector.load %arg4[%c0_8, %c1, %c0_9] : memref<2x25x768xf32, #tpu.memory_space<vmem>>, vector<2x16x768xf32>
    tpu.vector_store %arg4[%c0_8, %c1, %c0_9], %4 {strides = array<i32>} : memref<2x25x768xf32, #tpu.memory_space<vmem>>, vector<2x16x768xf32>,
    %c0_10 = arith.constant 0 : index
    %c0_11 = arith.constant 0 : index
    %c0_12 = arith.constant 0 : index
    %6 = vector.load %arg3[%c0_10, %c0_11, %c0_12] : memref<2x8x768xf32, #tpu.memory_space<vmem>>, vector<2x8x768xf32>
    %c0_13 = arith.constant 0 : index
    %c17 = arith.constant 17 : index
    %c0_14 = arith.constant 0 : index
    %7 = vector.load %arg4[%c0_13, %c17, %c0_14] : memref<2x25x768xf32, #tpu.memory_space<vmem>>, vector<2x8x768xf32>
    tpu.vector_store %arg4[%c0_13, %c17, %c0_14], %6 {strides = array<i32>} : memref<2x25x768xf32, #tpu.memory_space<vmem>>, vector<2x8x768xf32>,
    return
  }
  func.func @transform_0(%arg0: i32) -> (i32, i32, i32) {
    %c0_i32 = arith.constant 0 : i32
    %c0_i32_0 = arith.constant 0 : i32
    %c0_i32_1 = arith.constant 0 : i32
    %c0_i32_2 = arith.constant 0 : i32
    return %c0_i32, %c0_i32_0, %c0_i32_1 : i32, i32, i32
  }
  func.func @transform_1(%arg0: i32) -> (i32, i32, i32) {
    %c0_i32 = arith.constant 0 : i32
    %c0_i32_0 = arith.constant 0 : i32
    %c0_i32_1 = arith.constant 0 : i32
    return %arg0, %c0_i32, %c0_i32_0 : i32, i32, i32
  }
  func.func @transform_2(%arg0: i32) -> (i32, i32, i32) {
    %c0_i32 = arith.constant 0 : i32
    %c0_i32_0 = arith.constant 0 : i32
    %c0_i32_1 = arith.constant 0 : i32
    return %arg0, %c0_i32, %c0_i32_0 : i32, i32, i32
  }
  func.func @transform_3(%arg0: i32) -> (i32, i32, i32) {
    %c0_i32 = arith.constant 0 : i32
    %c0_i32_0 = arith.constant 0 : i32
    %c0_i32_1 = arith.constant 0 : i32
    return %arg0, %c0_i32, %c0_i32_0 : i32, i32, i32
  }
}

</mosaic_0001>

<llo_original>
// kernel: prompt_learner_forward.1
$region0: #{prompt_learner_forward.1}
  #allocation0 [shape = 'u32[]', space=smem, size = 0x4, offset = 0x4, fixed_abs, tag = 'smem constant byte address 0x4 - core index']
  #allocation1 [shape = 'u32[144,128]{1,0:T(1,128)}', space=vmem, size = 0x12000, scoped, tag = 'internal scratch']
  %s0 = inlined_call_operand.hbm [shape: f32[1,16,768], index: 0, kind: input, shape index: {}]
  %s1 = inlined_call_operand.hbm [shape: f32[4,1,768], index: 1, kind: input, shape index: {}]
  %s2 = inlined_call_operand.hbm [shape: f32[4,8,768], index: 2, kind: input, shape index: {}]
  %s3 = inlined_call_operand.vmem [shape: f32[4,25,768], index: 3, kind: output, shape index: {}]
  %s4 = sld [smem:[#allocation0]]
  $region57: #{prompt_learner_forward.1} parent=0
    _
  %s6 = ssub.s32 1, %s4
  %s7 = scalar_select 0, %s6, %s4
  $region1: #{prompt_learner_forward.1} parent=0
    #allocation2 [shape = 'u8[49152]{0}', space=vmem, size = 0xc000, scoped, tag = 'input window, operand 0, single buffered']
    #allocation3 [shape = 's32[2]{0}', space=sflag, size = 0x8, scoped, tag = 'scoped memory for prompt_learner_forward.1']
    #allocation4 [shape = 'u8[12288]{0}', space=vmem, size = 0x3000, scoped, tag = 'input window, operand 1']
    #allocation5 [shape = 's32[2]{0}', space=sflag, size = 0x8, scoped, tag = 'scoped memory for prompt_learner_forward.1']
    #allocation6 [shape = 'u8[98304]{0}', space=vmem, size = 0x18000, scoped, tag = 'input window, operand 2']
    %8 = vsyncpa [#allocation3], 0
    %9 = vsyncpa [#allocation5], 0
    %s10 = scalar_lea.sflag [#allocation5], 1
    %11 = vsyncpa %s10, 0
    loop: start=0, step=1, limit=4
    $region2: #{prompt_learner_forward.1} parent=1 // loop_pre_header
      _
    $region3: #{prompt_learner_forward.1} parent=1 // loop_header
      %s13 = sphi 0, %s17
      %p14 = scmp.ge.s32.totalorder %s13, 4
      %s21 = sphi 0, %s21
      %s23 = sphi 0, %s21
      %s24 = sphi 0, %s23
      %s38 = sphi 0, %s24
      %s44 = sphi 0, %s46
      %s47 = sphi 0, %s44
      %s48 = sphi 0, %s47
      %s64 = sphi 0, %s48
      %s70 = sphi 0, %s72
      %s73 = sphi 0, %s70
      %s74 = sphi 0, %s73
      %s90 = sphi 0, %s74
      %s96 = sphi 0, %s98
      %s99 = sphi 0, %s96
      %s100 = sphi 0, %s99
      %s116 = sphi 0, %s100
    $region4: #{prompt_learner_forward.1} parent=1 // loop_header_branch
      %16 = sbr.rel (%p14) target = $region8
    $region5: #{prompt_learner_forward.1} parent=1 // loop_body
      %s18 = ssub.s32 %s13, 1
      %s19 = ssub.s32 %s13, 2
      %s20 = sadd.s32 %s13, 1
      %s22 = sadd.s32 %s21, 1
      %p25 = scmp.eq.s32.totalorder %s13, 1
      %p26 = scmp.ne.s32.totalorder %s21, %s23
      %p27 = scmp.eq.s32.totalorder %s13, 0
      %p28 = por %p26, %p27
      %p29 = scmp.ne.s32.totalorder %s21, %s23
      %p30 = scmp.eq.s32.totalorder %s18, 1
      %p31 = por %p29, %p30
      %p32 = scmp.ne.s32.totalorder %s23, %s24
      %p33 = scmp.eq.s32.totalorder %s18, 0
      %p34 = por %p32, %p33
      %p35 = scmp.ne.s32.totalorder %s23, %s24
      %p36 = scmp.eq.s32.totalorder %s19, 1
      %p37 = por %p35, %p36
      %p39 = scmp.ne.s32.totalorder %s24, %s38
      %p40 = scmp.eq.s32.totalorder %s19, 0
      %p41 = por %p39, %p40
      %s42 = ssub.s32 %s13, %s20
      %p43 = scmp.eq.s32.totalorder %s42, 0
      %s45 = sadd.s32 %s44, 1
      %s46 = scalar_select %p43, %s44, %s45
      %p49 = pneg %p43
      %p50 = scmp.eq.s32.totalorder %s13, 1
      %p51 = por %p49, %p50
      %p52 = scmp.ne.s32.totalorder %s44, %s47
      %p53 = scmp.eq.s32.totalorder %s13, 0
      %p54 = por %p52, %p53
      %p55 = scmp.ne.s32.totalorder %s44, %s47
      %p56 = scmp.eq.s32.totalorder %s18, 1
      %p57 = por %p55, %p56
      %p58 = scmp.ne.s32.totalorder %s47, %s48
      %p59 = scmp.eq.s32.totalorder %s18, 0
      %p60 = por %p58, %p59
      %p61 = scmp.ne.s32.totalorder %s47, %s48
      %p62 = scmp.eq.s32.totalorder %s19, 1
      %p63 = por %p61, %p62
      %p65 = scmp.ne.s32.totalorder %s48, %s64
      %p66 = scmp.eq.s32.totalorder %s19, 0
      %p67 = por %p65, %p66
      %s68 = ssub.s32 %s13, %s20
      %p69 = scmp.eq.s32.totalorder %s68, 0
      %s71 = sadd.s32 %s70, 1
      %s72 = scalar_select %p69, %s70, %s71
      %p75 = pneg %p69
      %p76 = scmp.eq.s32.totalorder %s13, 1
      %p77 = por %p75, %p76
      %p78 = scmp.ne.s32.totalorder %s70, %s73
      %p79 = scmp.eq.s32.totalorder %s13, 0
      %p80 = por %p78, %p79
      %p81 = scmp.ne.s32.totalorder %s70, %s73
      %p82 = scmp.eq.s32.totalorder %s18, 1
      %p83 = por %p81, %p82
      %p84 = scmp.ne.s32.totalorder %s73, %s74
      %p85 = scmp.eq.s32.totalorder %s18, 0
      %p86 = por %p84, %p85
      %p87 = scmp.ne.s32.totalorder %s73, %s74
      %p88 = scmp.eq.s32.totalorder %s19, 1
      %p89 = por %p87, %p88
      %p91 = scmp.ne.s32.totalorder %s74, %s90
      %p92 = scmp.eq.s32.totalorder %s19, 0
      %p93 = por %p91, %p92
      %s94 = ssub.s32 %s13, %s20
      %p95 = scmp.eq.s32.totalorder %s94, 0
      %s97 = sadd.s32 %s96, 1
      %s98 = scalar_select %p95, %s96, %s97
      %p101 = pneg %p95
      %p102 = scmp.eq.s32.totalorder %s13, 1
      %p103 = por %p101, %p102
      %p104 = scmp.ne.s32.totalorder %s96, %s99
      %p105 = scmp.eq.s32.totalorder %s13, 0
      %p106 = por %p104, %p105
      %p107 = scmp.ne.s32.totalorder %s96, %s99
      %p108 = scmp.eq.s32.totalorder %s18, 1
      %p109 = por %p107, %p108
      %p110 = scmp.ne.s32.totalorder %s99, %s100
      %p111 = scmp.eq.s32.totalorder %s18, 0
      %p112 = por %p110, %p111
      %p113 = scmp.ne.s32.totalorder %s99, %s100
      %p114 = scmp.eq.s32.totalorder %s19, 1
      %p115 = por %p113, %p114
      %p117 = scmp.ne.s32.totalorder %s100, %s116
      %p118 = scmp.eq.s32.totalorder %s19, 0
      %p119 = por %p117, %p118
      %p120 = scmp.le.s32.totalorder 1, %s13
      %p121 = scmp.lt.s32.totalorder %s13, 3
      %p122 = pnand %p120, %p121
      %p123 = pneg %p122
      // Predicated region
      $region9: #{prompt_learner_forward.1} parent=5 // pred_check
        _
      $region10: #{prompt_learner_forward.1} parent=5 // pred_check_branch
        %125 = sbr.rel (%p122) target = $region12
      $region11: #{prompt_learner_forward.1} parent=5 // pred_region
        %s126 = ssub.s32 %s13, 1
        // Predicated region
        $region13: #{prompt_learner_forward.1} parent=11 // pred_check
          %p127 = pneg %p34
        $region14: #{prompt_learner_forward.1} parent=11 // pred_check_branch
          %129 = sbr.rel (%p127) target = $region16
        $region15: #{prompt_learner_forward.1} parent=11 // pred_region
          %s131 = ssub.s32 1536, 1536
          %132 = vsyncadd [#allocation3], %s131
          %s133 = sshll.u32 [#allocation2], 4
          %s134 = int_to_ptr.vmem [resolvable:$true] %s133
          %139 = dma.hbm_to_vmem [thread:$0]  %s0, 1536, %s134, [#allocation3], 768, 768, 48
        $region16: #{prompt_learner_forward.1} parent=11 // pred_fallthru
          _
      $region12: #{prompt_learner_forward.1} parent=5 // pred_fallthru
        _
      %p140 = scmp.lt.s32.totalorder %s13, 2
      // Predicated region
      $region17: #{prompt_learner_forward.1} parent=5 // pred_check
        %p141 = pneg %p140
      $region18: #{prompt_learner_forward.1} parent=5 // pred_check_branch
        %143 = sbr.rel (%p141) target = $region20
      $region19: #{prompt_learner_forward.1} parent=5 // pred_region
        // Predicated region
        $region21: #{prompt_learner_forward.1} parent=19 // pred_check
          %p144 = pneg %p54
        $region22: #{prompt_learner_forward.1} parent=19 // pred_check_branch
          %146 = sbr.rel (%p144) target = $region24
        $region23: #{prompt_learner_forward.1} parent=19 // pred_region
          %s147 = sand.u32 %s13, 1
          %s148 = scalar_lea.sflag [#allocation5], %s147
          %s149 = sand.u32 %s44, 1
          %s150 = smul.addr %s149, 12
          %s151 = scalar_lea.vmem [#allocation4], %s150
          %s152 = smul.u32 2, %s13
          %s154 = ssub.s32 192, 192
          %155 = vsyncadd %s148, %s154
          %s156 = smul.addr %s152, 6
          %s157 = smul.addr %s156, 16
          %s158 = scalar_lea.hbm %s1, %s157
          %s159 = sshll.u32 %s151, 4
          %s160 = int_to_ptr.vmem [resolvable:$true] %s159
          %165 = dma.hbm_to_vmem [thread:$0]  %s158, 192, %s160, %s148, 96, 96, 6
        $region24: #{prompt_learner_forward.1} parent=19 // pred_fallthru
          _
        // Predicated region
        $region25: #{prompt_learner_forward.1} parent=19 // pred_check
          %p166 = pneg %p80
        $region26: #{prompt_learner_forward.1} parent=19 // pred_check_branch
          %168 = sbr.rel (%p166) target = $region28
        $region27: #{prompt_learner_forward.1} parent=19 // pred_region
          %s169 = sand.u32 %s13, 1
          %s170 = scalar_lea.sflag [#allocation5], %s169
          %s171 = sand.u32 %s70, 1
          %s172 = smul.addr %s171, 96
          %s173 = scalar_lea.vmem [#allocation6], %s172
          %s174 = smul.u32 2, %s13
          %s176 = ssub.s32 1536, 1536
          %177 = vsyncadd %s170, %s176
          %s178 = smul.addr %s174, 6
          %s179 = smul.addr %s178, 128
          %s180 = scalar_lea.hbm %s2, %s179
          %s181 = sshll.u32 %s173, 4
          %s182 = int_to_ptr.vmem [resolvable:$true] %s181
          %187 = dma.hbm_to_vmem [thread:$0]  %s180, 1536, %s182, %s170, 768, 768, 48
        $region28: #{prompt_learner_forward.1} parent=19 // pred_fallthru
          _
      $region20: #{prompt_learner_forward.1} parent=5 // pred_fallthru
        _
      %p188 = scmp.le.s32.totalorder 1, %s13
      %p189 = scmp.lt.s32.totalorder %s13, 3
      %p190 = pnand %p188, %p189
      %p191 = pneg %p190
      // Predicated region
      $region29: #{prompt_learner_forward.1} parent=5 // pred_check
        _
      $region30: #{prompt_learner_forward.1} parent=5 // pred_check_branch
        %193 = sbr.rel (%p190) target = $region32
      $region31: #{prompt_learner_forward.1} parent=5 // pred_region
        %s194 = ssub.s32 %s13, 1
        // Predicated region
        $region33: #{prompt_learner_forward.1} parent=31 // pred_check
          %p195 = pneg %p34
        $region34: #{prompt_learner_forward.1} parent=31 // pred_check_branch
          %197 = sbr.rel (%p195) target = $region36
        $region35: #{prompt_learner_forward.1} parent=31 // pred_region
          %198 = dma.done [#allocation3], 1536
        $region36: #{prompt_learner_forward.1} parent=31 // pred_fallthru
          _
        %s199 = sand.u32 %s18, 1
        %s200 = scalar_lea.sflag [#allocation5], %s199
        %s201 = sand.u32 %s47, 1
        %s202 = smul.addr %s201, 12
        %s203 = scalar_lea.vmem [#allocation4], %s202
        // Predicated region
        $region37: #{prompt_learner_forward.1} parent=31 // pred_check
          %p204 = pneg %p60
        $region38: #{prompt_learner_forward.1} parent=31 // pred_check_branch
          %206 = sbr.rel (%p204) target = $region40
        $region39: #{prompt_learner_forward.1} parent=31 // pred_region
          %207 = dma.done %s200, 192
        $region40: #{prompt_learner_forward.1} parent=31 // pred_fallthru
          _
        %s208 = sand.u32 %s18, 1
        %s209 = scalar_lea.sflag [#allocation5], %s208
        %s210 = sand.u32 %s73, 1
        %s211 = smul.addr %s210, 96
        %s212 = scalar_lea.vmem [#allocation6], %s211
        // Predicated region
        $region41: #{prompt_learner_forward.1} parent=31 // pred_check
          %p213 = pneg %p86
        $region42: #{prompt_learner_forward.1} parent=31 // pred_check_branch
          %215 = sbr.rel (%p213) target = $region44
        $region43: #{prompt_learner_forward.1} parent=31 // pred_region
          %216 = dma.done %s209, 1536
        $region44: #{prompt_learner_forward.1} parent=31 // pred_fallthru
          _
        %p217 = pneg %p34
        %p218 = pneg %p31
        %s219 = sand.u32 %s18, 1
        %s220 = scalar_lea.sflag [#allocation5], %s219
        %s221 = sand.u32 %s47, 1
        %s222 = smul.addr %s221, 12
        %s223 = scalar_lea.vmem [#allocation4], %s222
        %p224 = pneg %p60
        %p225 = pneg %p57
        %s226 = sand.u32 %s18, 1
        %s227 = scalar_lea.sflag [#allocation5], %s226
        %s228 = sand.u32 %s73, 1
        %s229 = smul.addr %s228, 96
        %s230 = scalar_lea.vmem [#allocation6], %s229
        %p231 = pneg %p86
        %p232 = pneg %p83
        %p233 = pneg %p112
        %p234 = pneg %p109
        %s235 = smul.u32 2, %s18
        %p236 = scmp.lt.s32.totalorder %s235, 3
        %s237 = scalar_select %p236, %s235, 3
        %s238 = smul.addr %s237, 24
        %s239 = smul.addr %s238, 8
        %s240 = scalar_lea.vmem %s3, %s239
        %s241 = smul.u32 2, %s18
        %s242 = smul.u32 2, %s18
        %s243 = smul.u32 2, %s18
        %p244 = scmp.lt.s32.totalorder %s243, 3
        %s245 = scalar_select %p244, %s243, 3
        %s246 = smul.addr %s245, 24
        %s247 = smul.addr %s246, 8
        %s248 = scalar_lea.vmem %s3, %s247
        %s249 = smul.u32 2, %s18
        %v250 = vld [vmem:[%s203] sm:$0x3f]
        %v251 = vld [vmem:[%s203 + $0x6] sm:$0x3f]
        %v252 = vlaneseq
        %vm253 = vcmp.ge.s32.totalorder %v252, 0
        %vm254 = vcmp.lt.s32.totalorder %v252, 768
        %vm255 = vmand %vm253, %vm254
        %256 = vst.msk [vmem:[%s248] ss:$8 sm:$0xf] %vm255, %v250
        %257 = vst.msk [vmem:[%s248] ss:$8 sm:$0x30] %vm255, %v250
        %s258 = scalar_lea.vmem %s248, 192
        %259 = vst.msk [vmem:[%s258] ss:$8 sm:$0xf] %vm255, %v251
        %260 = vst.msk [vmem:[%s258] ss:$8 sm:$0x30] %vm255, %v251
        %v261 = vld [vmem:[#allocation2] sm:$0xff]
        %v262 = vld [vmem:[#allocation2 + $0x8] sm:$0xff]
        %v263 = vld [vmem:[#allocation2 + $0x10] sm:$0xff]
        %v264 = vld [vmem:[#allocation2 + $0x18] sm:$0xff]
        %v265 = vld [vmem:[#allocation2 + $0x20] sm:$0xff]
        %v266 = vld [vmem:[#allocation2 + $0x28] sm:$0xff]
        %v267 = vld [vmem:[#allocation2 + $0x30] sm:$0xff]
        %v268 = vld [vmem:[#allocation2 + $0x38] sm:$0xff]
        %v269 = vld [vmem:[#allocation2 + $0x40] sm:$0xff]
        %v270 = vld [vmem:[#allocation2 + $0x48] sm:$0xff]
        %v271 = vld [vmem:[#allocation2 + $0x50] sm:$0xff]
        %v272 = vld [vmem:[#allocation2 + $0x58] sm:$0xff]
        %vm285 = vcmask 1040384
        %v286 = vrot.slane %v261, 7
        %v287 = vrot.slane %v262, 7
        %v288 = vrot.slane %v263, 7
        %v289 = vrot.slane %v264, 7
        %v290 = vrot.slane %v265, 7
        %v291 = vrot.slane %v266, 7
        %v292 = vrot.slane %v267, 7
        %v293 = vsel %vm285, %v286, %v292
        %v294 = vrot.slane %v268, 7
        %v295 = vsel %vm285, %v287, %v294
        %v296 = vrot.slane %v269, 7
        %v297 = vsel %vm285, %v288, %v296
        %v298 = vrot.slane %v270, 7
        %v299 = vsel %vm285, %v289, %v298
        %v300 = vrot.slane %v271, 7
        %v301 = vsel %vm285, %v290, %v300
        %v302 = vrot.slane %v272, 7
        %v303 = vsel %vm285, %v291, %v302
        %322 = vst [vmem:[%s248] sm:$0xfe] %v286
        %323 = vst [vmem:[%s248 + $0x8] sm:$0xfe] %v287
        %324 = vst [vmem:[%s248 + $0x10] sm:$0xfe] %v288
        %325 = vst [vmem:[%s248 + $0x18] sm:$0xfe] %v289
        %326 = vst [vmem:[%s248 + $0x20] sm:$0xfe] %v290
        %327 = vst [vmem:[%s248 + $0x28] sm:$0xfe] %v291
        %328 = vst [vmem:[%s248 + $0x30] sm:$0xff] %v293
        %329 = vst [vmem:[%s248 + $0x38] sm:$0xff] %v295
        %330 = vst [vmem:[%s248 + $0x40] sm:$0xff] %v297
        %331 = vst [vmem:[%s248 + $0x48] sm:$0xff] %v299
        %332 = vst [vmem:[%s248 + $0x50] sm:$0xff] %v301
        %333 = vst [vmem:[%s248 + $0x58] sm:$0xff] %v303
        %334 = vst [vmem:[%s248 + $0x60] sm:$0x1] %v292
        %335 = vst [vmem:[%s248 + $0x68] sm:$0x1] %v294
        %336 = vst [vmem:[%s248 + $0x70] sm:$0x1] %v296
        %337 = vst [vmem:[%s248 + $0x78] sm:$0x1] %v298
        %338 = vst [vmem:[%s248 + $0x80] sm:$0x1] %v300
        %339 = vst [vmem:[%s248 + $0x88] sm:$0x1] %v302
        %340 = vst [vmem:[%s248 + $0xc0] sm:$0xfe] %v286
        %341 = vst [vmem:[%s248 + $0xc8] sm:$0xfe] %v287
        %342 = vst [vmem:[%s248 + $0xd0] sm:$0xfe] %v288
        %343 = vst [vmem:[%s248 + $0xd8] sm:$0xfe] %v289
        %344 = vst [vmem:[%s248 + $0xe0] sm:$0xfe] %v290
        %345 = vst [vmem:[%s248 + $0xe8] sm:$0xfe] %v291
        %346 = vst [vmem:[%s248 + $0xf0] sm:$0xff] %v293
        %347 = vst [vmem:[%s248 + $0xf8] sm:$0xff] %v295
        %348 = vst [vmem:[%s248 + $0x100] sm:$0xff] %v297
        %349 = vst [vmem:[%s248 + $0x108] sm:$0xff] %v299
        %350 = vst [vmem:[%s248 + $0x110] sm:$0xff] %v301
        %351 = vst [vmem:[%s248 + $0x118] sm:$0xff] %v303
        %352 = vst [vmem:[%s248 + $0x120] sm:$0x1] %v292
        %353 = vst [vmem:[%s248 + $0x128] sm:$0x1] %v294
        %354 = vst [vmem:[%s248 + $0x130] sm:$0x1] %v296
        %355 = vst [vmem:[%s248 + $0x138] sm:$0x1] %v298
        %356 = vst [vmem:[%s248 + $0x140] sm:$0x1] %v300
        %357 = vst [vmem:[%s248 + $0x148] sm:$0x1] %v302
        %v358 = vld [vmem:[%s212] sm:$0xff]
        %v359 = vld [vmem:[%s212 + $0x8] sm:$0xff]
        %v360 = vld [vmem:[%s212 + $0x10] sm:$0xff]
        %v361 = vld [vmem:[%s212 + $0x18] sm:$0xff]
        %v362 = vld [vmem:[%s212 + $0x20] sm:$0xff]
        %v363 = vld [vmem:[%s212 + $0x28] sm:$0xff]
        %v364 = vld [vmem:[%s212 + $0x30] sm:$0xff]
        %v365 = vld [vmem:[%s212 + $0x38] sm:$0xff]
        %v366 = vld [vmem:[%s212 + $0x40] sm:$0xff]
        %v367 = vld [vmem:[%s212 + $0x48] sm:$0xff]
        %v368 = vld [vmem:[%s212 + $0x50] sm:$0xff]
        %v369 = vld [vmem:[%s212 + $0x58] sm:$0xff]
        %v382 = vrot.slane %v358, 7
        %v383 = vrot.slane %v359, 7
        %v384 = vrot.slane %v360, 7
        %v385 = vrot.slane %v361, 7
        %v386 = vrot.slane %v362, 7
        %v387 = vrot.slane %v363, 7
        %v388 = vrot.slane %v364, 7
        %v389 = vrot.slane %v365, 7
        %v390 = vrot.slane %v366, 7
        %v391 = vrot.slane %v367, 7
        %v392 = vrot.slane %v368, 7
        %v393 = vrot.slane %v369, 7
        %406 = vst [vmem:[%s248 + $0x60] sm:$0xfe] %v382
        %407 = vst [vmem:[%s248 + $0x68] sm:$0xfe] %v383
        %408 = vst [vmem:[%s248 + $0x70] sm:$0xfe] %v384
        %409 = vst [vmem:[%s248 + $0x78] sm:$0xfe] %v385
        %410 = vst [vmem:[%s248 + $0x80] sm:$0xfe] %v386
        %411 = vst [vmem:[%s248 + $0x88] sm:$0xfe] %v387
        %412 = vst [vmem:[%s248 + $0x90] sm:$0x1] %v382
        %413 = vst [vmem:[%s248 + $0x98] sm:$0x1] %v383
        %414 = vst [vmem:[%s248 + $0xa0] sm:$0x1] %v384
        %415 = vst [vmem:[%s248 + $0xa8] sm:$0x1] %v385
        %416 = vst [vmem:[%s248 + $0xb0] sm:$0x1] %v386
        %417 = vst [vmem:[%s248 + $0xb8] sm:$0x1] %v387
        %418 = vst [vmem:[%s248 + $0x120] sm:$0xfe] %v388
        %419 = vst [vmem:[%s248 + $0x128] sm:$0xfe] %v389
        %420 = vst [vmem:[%s248 + $0x130] sm:$0xfe] %v390
        %421 = vst [vmem:[%s248 + $0x138] sm:$0xfe] %v391
        %422 = vst [vmem:[%s248 + $0x140] sm:$0xfe] %v392
        %423 = vst [vmem:[%s248 + $0x148] sm:$0xfe] %v393
        %424 = vst [vmem:[%s248 + $0x150] sm:$0x1] %v388
        %425 = vst [vmem:[%s248 + $0x158] sm:$0x1] %v389
        %426 = vst [vmem:[%s248 + $0x160] sm:$0x1] %v390
        %427 = vst [vmem:[%s248 + $0x168] sm:$0x1] %v391
        %428 = vst [vmem:[%s248 + $0x170] sm:$0x1] %v392
        %429 = vst [vmem:[%s248 + $0x178] sm:$0x1] %v393
        %s430 = smul.u32 2, %s18
        %p431 = scmp.lt.s32.totalorder %s430, 3
        %s432 = scalar_select %p431, %s430, 3
        %s433 = smul.addr %s432, 24
        %s434 = smul.addr %s433, 8
        %s435 = scalar_lea.vmem %s3, %s434
        // Predicated region
        $region45: #{prompt_learner_forward.1} parent=31 // pred_check
          %p436 = pneg %p109
        $region46: #{prompt_learner_forward.1} parent=31 // pred_check_branch
          %438 = sbr.rel (%p436) target = $region48
        $region47: #{prompt_learner_forward.1} parent=31 // pred_region
          %s439 = smul.u32 2, %s18
        $region48: #{prompt_learner_forward.1} parent=31 // pred_fallthru
          _
      $region32: #{prompt_learner_forward.1} parent=5 // pred_fallthru
        _
      %p440 = scmp.le.s32.totalorder 2, %s13
      // Predicated region
      $region49: #{prompt_learner_forward.1} parent=5 // pred_check
        %p441 = pneg %p440
      $region50: #{prompt_learner_forward.1} parent=5 // pred_check_branch
        %443 = sbr.rel (%p441) target = $region52
      $region51: #{prompt_learner_forward.1} parent=5 // pred_region
        %s444 = ssub.s32 %s13, 2
        // Predicated region
        $region53: #{prompt_learner_forward.1} parent=51 // pred_check
          %p445 = pneg %p115
        $region54: #{prompt_learner_forward.1} parent=51 // pred_check_branch
          %447 = sbr.rel (%p445) target = $region56
        $region55: #{prompt_learner_forward.1} parent=51 // pred_region
          %s448 = smul.u32 2, %s19
          %p449 = scmp.lt.s32.totalorder %s448, 3
          %s450 = scalar_select %p449, %s448, 3
          %s451 = smul.addr %s450, 24
          %s452 = smul.addr %s451, 8
          %s453 = scalar_lea.vmem %s3, %s452
        $region56: #{prompt_learner_forward.1} parent=51 // pred_fallthru
          _
      $region52: #{prompt_learner_forward.1} parent=5 // pred_fallthru
        _
    $region6: #{prompt_learner_forward.1} parent=1 // loop_footer
      %s17 = sadd.s32 1, %s13
    $region7: #{prompt_learner_forward.1} parent=1 // loop_footer_branch
      %12 = sbr.rel target = $region3
    $region8: #{prompt_learner_forward.1} parent=1 // loop_exit
      _
    %454 = vsyncpa [#allocation3], 1
    %s455 = scalar_lea.sflag [#allocation3], 1
    %456 = vsyncpa %s455, 1
    %457 = vsyncpa [#allocation5], 1
    %s458 = scalar_lea.sflag [#allocation5], 1
    %459 = vsyncpa %s458, 1

</llo_original>
